<compile_context>
chip_gen: v5e
topology: v5e:2x2
jax: 0.10.0
libtpu: 0.0.40
codegen_flags: <defaults>
</compile_context>

<pallas_src>
import math

import jax
import jax.numpy as jnp
from jax.experimental import pallas as pl
from jax.experimental.pallas import tpu as pltpu


def _round_up(v: int, m: int) -> int:
    return ((v + m - 1) // m) * m


def _make_rastrigin_kernel(a: float):
    two_pi = float(2.0 * math.pi)
    a = float(a)

    def kernel(x_ref, o_ref, acc_ref):
        # x_ref: (block_b, block_d) VMEM tile; o_ref, acc_ref: (block_b, 1) f32.
        k = pl.program_id(1)

        @pl.when(k == 0)
        def _init():
            acc_ref[...] = jnp.zeros_like(acc_ref)

        x = x_ref[...].astype(jnp.float32)
        # a*n + sum(x^2 - a*cos(2*pi*x)) == sum(x^2 + a*(1 - cos(2*pi*x)))
        # => zero padding contributes exactly 0.  cos() runs on the EUP slot (near-free
        # relative to the HBM stream); the adds/muls sit on the VPU.
        term = x * x + a * (1.0 - jnp.cos(two_pi * x))
        acc_ref[...] += jnp.sum(term, axis=-1, keepdims=True)

        @pl.when(k == pl.num_programs(1) - 1)
        def _finalize():
            o_ref[...] = acc_ref[...]

    return kernel


def _choose_tiles(B: int, D: int, block_b, block_d, target_tile_elems: int):
    # --- reduction (D) tiling ---
    if block_d is None:
        block_d = D if D <= 8192 else 2048  # block huge D so batch tiles stay tall
    if block_d >= D:
        block_d, d_pad = D, D               # full reduction dim in one tile (no 128-mult needed)
    else:
        block_d = max(128, (min(block_d, D) // 128) * 128)  # blocked => multiple of 128 lanes
        d_pad = _round_up(D, block_d)

    # --- batch (B) tiling: target ~target_tile_elems per x tile ---
    b_full = _round_up(max(B, 1), 8)
    if block_b is None:
        rows = max(8, target_tile_elems // max(block_d, 1))
        if rows >= b_full:
            block_b = b_full                # whole (padded) batch in one block
        else:
            block_b = max(8, (rows // 8) * 8)  # sublane dim only needs multiple of 8
    else:
        block_b = max(8, _round_up(block_b, 8))
    block_b = min(block_b, b_full)
    b_pad = _round_up(max(B, 1), block_b)
    return block_b, block_d, b_pad, d_pad


def rastrigin_energy(
    x: jax.Array,
    a: float = 10.0,
    *,
    block_b: int | None = None,
    block_d: int | None = None,
    target_tile_elems: int = 1 << 20,  # ~4 MiB of f32 per x tile
) -> jax.Array:
    """Rastrigin energy per sample. x: (..., dim) -> (...,) float32 (scalar energy per row)."""
    if x.ndim == 1:
        x = x[None, :]
    lead_shape = x.shape[:-1]
    D = x.shape[-1]
    x2d = x.reshape((-1, D))
    B = x2d.shape[0]

    blk_b, blk_d, b_pad, d_pad = _choose_tiles(B, D, block_b, block_d, target_tile_elems)
    if (b_pad != B) or (d_pad != D):
        x2d = jnp.pad(x2d, ((0, b_pad - B), (0, d_pad - D)))

    nb = b_pad // blk_b
    nk = d_pad // blk_d

    itemsize = jnp.dtype(x2d.dtype).itemsize
    tile_bytes = blk_b * blk_d * itemsize
    # Explicit scoped-VMEM budget: above the 16/32 MiB defaults, headroom under v7x's 64 MiB.
    vmem_limit = int(max(32 << 20, min(48 << 20, 4 * tile_bytes + (4 << 20))))

    cost = pl.CostEstimate(
        flops=5 * b_pad * d_pad,
        transcendentals=b_pad * d_pad,
        bytes_accessed=b_pad * d_pad * itemsize + b_pad * 4,
    )

    out = pl.pallas_call(
        _make_rastrigin_kernel(a),
        out_shape=jax.ShapeDtypeStruct((b_pad, 1), jnp.float32),
        grid_spec=pltpu.PrefetchScalarGridSpec(
            num_scalar_prefetch=0,
            grid=(nb, nk),
            in_specs=[pl.BlockSpec((blk_b, blk_d), lambda i, k: (i, k))],
            out_specs=pl.BlockSpec((blk_b, 1), lambda i, k: (i, 0)),
            scratch_shapes=[pltpu.VMEM((blk_b, 1), jnp.float32)],
        ),
        compiler_params=pltpu.CompilerParams(
            dimension_semantics=("parallel", "arbitrary"),
            vmem_limit_bytes=vmem_limit,
        ),
        cost_estimate=cost,
    )(x2d)

    return out[:B, 0].reshape(lead_shape)


def rastrigin_energy_ref(x: jax.Array, a: float = 10.0) -> jax.Array:
    if x.ndim == 1:
        x = x[None, :]
    n = x.shape[-1]
    xf = x.astype(jnp.float32)
    return a * n + jnp.sum(xf**2 - a * jnp.cos(2.0 * math.pi * xf), axis=-1)


if __name__ == "__main__":
    key = jax.random.PRNGKey(0)
    k1, k2 = jax.random.split(key)

    # 1) Basic check: small (batch, dim), full-D tile, single grid step.
    B, D = 8, 32
    x = jax.random.normal(k1, (B, D), dtype=jnp.float32) * 3.0
    e = jax.block_until_ready(rastrigin_energy(x, a=10.0))
    ref = rastrigin_energy_ref(x, a=10.0)
    assert e.shape == (B,)
    assert jnp.allclose(e, ref, rtol=1e-4, atol=1e-2), (e, ref)

    # 2) Exercise blocked reduction axis + batch/dim zero-padding (B=5, D=300 -> 3 k-steps).
    B2, D2 = 5, 300
    x2 = jax.random.normal(k2, (B2, D2), dtype=jnp.float32) * 2.0
    e2 = jax.block_until_ready(rastrigin_energy(x2, a=10.0, block_b=8, block_d=128))
    ref2 = rastrigin_energy_ref(x2, a=10.0)
    assert e2.shape == (B2,)
    assert jnp.allclose(e2, ref2, rtol=1e-4, atol=1e-2), (e2, ref2)

    # 3) 1-D input path (matches torch module's unsqueeze) -> energy shape (1,).
    x1d = x[0]
    e1d = jax.block_until_ready(rastrigin_energy(x1d, a=10.0))
    assert e1d.shape == (1,)
    assert jnp.allclose(e1d, ref[:1], rtol=1e-4, atol=1e-2)

    # 4) bf16 input stays bf16 in HBM (bandwidth lever on v5e); compute is f32 in-kernel.
    xb = x.astype(jnp.bfloat16)
    eb = jax.block_until_ready(rastrigin_energy(xb, a=10.0))
    refb = rastrigin_energy_ref(xb.astype(jnp.float32), a=10.0)
    assert jnp.allclose(eb, refb, rtol=1e-4, atol=1e-2), (eb, refb)

    print("KERNEL_OK")
</pallas_src>

<mosaic_0001>
module attributes {stable_mosaic.version = 11 : i64} {
  func.func @kernel(%arg0: i32, %arg1: i32, %arg2: memref<8x32xf32, #tpu.memory_space<vmem>>, %arg3: memref<8x1xf32, #tpu.memory_space<vmem>>, %arg4: memref<8x1xf32, #tpu.memory_space<vmem>>) attributes {dimension_semantics = [#tpu.dimension_semantics<parallel>, #tpu.dimension_semantics<arbitrary>], iteration_bounds = array<i64: 1, 1>, scalar_prefetch = 0 : i64, scratch_operands = 1 : i64, tpu.core_type = #tpu.core_type<tc>, window_params = [{transform_indices = @transform_0, window_bounds = array<i64: 8, 32>}, {transform_indices = @transform_1, window_bounds = array<i64: 8, 1>}]} {
    %c0_i32 = arith.constant 0 : i32
    %0 = arith.cmpi eq, %arg1, %c0_i32 : i32
    %1 = arith.extui %0 : i1 to i32
    %c0_i32_0 = arith.constant 0 : i32
    %2 = arith.cmpi ne, %1, %c0_i32_0 : i32
    scf.if %2 {
      %cst_11 = arith.constant 0.000000e+00 : f32
      %21 = vector.broadcast %cst_11 : f32 to vector<8x1xf32>
      %c0_12 = arith.constant 0 : index
      %c0_13 = arith.constant 0 : index
      %22 = vector.load %arg4[%c0_12, %c0_13] : memref<8x1xf32, #tpu.memory_space<vmem>>, vector<8x1xf32>
      tpu.vector_store %arg4[%c0_12, %c0_13], %21 {strides = array<i32>} : memref<8x1xf32, #tpu.memory_space<vmem>>, vector<8x1xf32>,
    } else {
    }
    %c0 = arith.constant 0 : index
    %c0_1 = arith.constant 0 : index
    %3 = vector.load %arg2[%c0, %c0_1] : memref<8x32xf32, #tpu.memory_space<vmem>>, vector<8x32xf32>
    %4 = arith.mulf %3, %3 : vector<8x32xf32>
    %cst = arith.constant 6.28318548 : f32
    %5 = vector.broadcast %cst : f32 to vector<8x32xf32>
    %6 = arith.mulf %5, %3 : vector<8x32xf32>
    %7 = math.cos %6 : vector<8x32xf32>
    %cst_2 = arith.constant 1.000000e+00 : f32
    %8 = vector.broadcast %cst_2 : f32 to vector<8x32xf32>
    %9 = arith.subf %8, %7 : vector<8x32xf32>
    %cst_3 = arith.constant 1.000000e+01 : f32
    %10 = vector.broadcast %cst_3 : f32 to vector<8x32xf32>
    %11 = arith.mulf %10, %9 : vector<8x32xf32>
    %12 = arith.addf %4, %11 : vector<8x32xf32>
    %c0_4 = arith.constant 0 : index
    %c0_5 = arith.constant 0 : index
    %13 = vector.load %arg4[%c0_4, %c0_5] : memref<8x1xf32, #tpu.memory_space<vmem>>, vector<8x1xf32>
    %cst_6 = arith.constant dense<0.000000e+00> : vector<8xf32>
    %14 = vector.multi_reduction <add>, %12, %cst_6 [1] : vector<8x32xf32> to vector<8xf32>
    %15 = vector.shape_cast %14 : vector<8xf32> to vector<8x1xf32>
    %16 = arith.addf %13, %15 : vector<8x1xf32>
    %c0_7 = arith.constant 0 : index
    %c0_8 = arith.constant 0 : index
    %17 = vector.load %arg4[%c0_7, %c0_8] : memref<8x1xf32, #tpu.memory_space<vmem>>, vector<8x1xf32>
    tpu.vector_store %arg4[%c0_7, %c0_8], %16 {strides = array<i32>} : memref<8x1xf32, #tpu.memory_space<vmem>>, vector<8x1xf32>,
    %c0_i32_9 = arith.constant 0 : i32
    %18 = arith.cmpi eq, %arg1, %c0_i32_9 : i32
    %19 = arith.extui %18 : i1 to i32
    %c0_i32_10 = arith.constant 0 : i32
    %20 = arith.cmpi ne, %19, %c0_i32_10 : i32
    scf.if %20 {
      %c0_11 = arith.constant 0 : index
      %c0_12 = arith.constant 0 : index
      %21 = vector.load %arg4[%c0_11, %c0_12] : memref<8x1xf32, #tpu.memory_space<vmem>>, vector<8x1xf32>
      %c0_13 = arith.constant 0 : index
      %c0_14 = arith.constant 0 : index
      %22 = vector.load %arg3[%c0_13, %c0_14] : memref<8x1xf32, #tpu.memory_space<vmem>>, vector<8x1xf32>
      tpu.vector_store %arg3[%c0_13, %c0_14], %21 {strides = array<i32>} : memref<8x1xf32, #tpu.memory_space<vmem>>, vector<8x1xf32>,
    } else {
    }
    return
  }
  func.func @transform_0(%arg0: i32, %arg1: i32) -> (i32, i32) {
    %c0_i32 = arith.constant 0 : i32
    return %arg0, %arg1 : i32, i32
  }
  func.func @transform_1(%arg0: i32, %arg1: i32) -> (i32, i32) {
    %c0_i32 = arith.constant 0 : i32
    %c0_i32_0 = arith.constant 0 : i32
    return %arg0, %c0_i32 : i32, i32
  }
}

</mosaic_0001>

<llo_original>
// kernel: tpu_custom_call.1
$region0: #{tpu_custom_call.1}
  #allocation0 [shape = 'u32[]', space=smem, size = 0x4, offset = 0x4, fixed_abs, tag = 'smem constant byte address 0x4 - core index']
  #allocation1 [shape = 'u32[72,128]{1,0:T(1,128)}', space=vmem, size = 0x9000, scoped, tag = 'internal scratch']
  #allocation2 [shape = 'f32[8,1]{1,0:T(8,128)}', space=vmem, size = 0x1000, scoped, tag = 'scratch operand']
  %s0 = inlined_call_operand.hbm [shape: f32[8,32], index: 0, kind: input, shape index: {}]
  %s1 = inlined_call_operand.vmem [shape: f32[8,1], index: 1, kind: output, shape index: {}]
  %s2 = sld [smem:[#allocation0]]
  $region26: #{tpu_custom_call.1} parent=0
    _
  %s4 = ssub.s32 1, %s2
  %s5 = scalar_select 0, %s4, %s2
  $region1: #{tpu_custom_call.1} parent=0
    #allocation3 [shape = 'u8[4096]{0}', space=vmem, size = 0x1000, scoped, tag = 'input window, operand 0, single buffered']
    #allocation4 [shape = 's32[1]{0}', space=sflag, size = 0x4, scoped, tag = 'scoped memory for tpu_custom_call.1']
    %6 = vsyncpa [#allocation4], 0
    // Predicated region
    $region2: #{tpu_custom_call.1} parent=1 // pred_check
      _
    $region3: #{tpu_custom_call.1} parent=1 // pred_check_branch
      %8 = sbr.rel (0) target = $region5
    $region4: #{tpu_custom_call.1} parent=1 // pred_region
      %10 = vsyncadd [#allocation4], 0
      %s12 = sshll.u32 %s0, 4
      %s13 = int_to_ptr.hbm [resolvable:$true] %s12
      %s14 = sshll.u32 [#allocation3], 4
      %s15 = int_to_ptr.vmem [resolvable:$true] %s14
      %17 = dma.hbm_to_vmem [thread:$0]  %s13, 128, %s15, [#allocation4]
    $region5: #{tpu_custom_call.1} parent=1 // pred_fallthru
      _
    // Predicated region
    $region6: #{tpu_custom_call.1} parent=1 // pred_check
      _
    $region7: #{tpu_custom_call.1} parent=1 // pred_check_branch
      %19 = sbr.rel (0) target = $region9
    $region8: #{tpu_custom_call.1} parent=1 // pred_region
      %21 = dma.done [#allocation4], 128
    $region9: #{tpu_custom_call.1} parent=1 // pred_fallthru
      _
    %p22 = scmp.eq.s32.totalorder 0, 0
    // Predicated region
    $region10: #{tpu_custom_call.1} parent=1 // pred_check
      %p23 = pneg %p22
    $region11: #{tpu_custom_call.1} parent=1 // pred_check_branch
      %25 = sbr.rel (%p23) target = $region13
    $region12: #{tpu_custom_call.1} parent=1 // pred_region
      %vm26 = vcmask 7168
      %27 = vst.msk [vmem:[#allocation2] sm:$0xff] %vm26, 0.0
    $region13: #{tpu_custom_call.1} parent=1 // pred_fallthru
      _
    %v28 = vld [vmem:[#allocation3] sm:$0xff]
    %v29 = vmul.f32 %v28, %v28
    %v30 = vmul.f32 %v28, 6.2831855
    %v31 = vand.u32 2147483647, %v30
    %vm32 = vcmp.le.f32.partialorder %v31, 0.7853982
    %vm33 = vcmp.lt.s32.totalorder %v30, 0
    %v34 = vand.u32 %v30, 2139095040
    %v35 = vshrl.u32 %v34, 23
    %v36 = vsub.s32 %v35, 127
    %v37 = vand.u32 2147483647, %v30
    %v38 = vand.u32 %v37, 8388607
    %v39 = vor.u32 %v38, 8388608
    %v40 = vsub.s32 0, %v39
    %v41 = vadd.s32 %v36, 1
    %vm42 = vcmp.gt.s32.totalorder %v41, 0
    %v43 = vsel %vm42, %v41, 0
    %v44 = vshrl.u32 %v43, 5
    %v45 = vand.u32 %v43, 31
    %v46 = vsub.s32 32, %v45
    %v47 = vshrl.u32 683565275, %v46
    %v48 = vshll.u32 683565275, %v45
    %v49 = vshrl.u32 2475754826, %v46
    %v50 = vor.u32 %v48, %v49
    %v51 = vshll.u32 2475754826, %v45
    %v52 = vshrl.u32 2131351028, %v46
    %v53 = vor.u32 %v51, %v52
    %v54 = vshll.u32 2131351028, %v45
    %v55 = vshrl.u32 2102212464, %v46
    %v56 = vor.u32 %v54, %v55
    %v57 = vshll.u32 2102212464, %v45
    %v58 = vshrl.u32 920167782, %v46
    %v59 = vor.u32 %v57, %v58
    %v60 = vshll.u32 920167782, %v45
    %v61 = vshrl.u32 1326507024, %v46
    %v62 = vor.u32 %v60, %v61
    %vm63 = vcmp.lt.s32.totalorder %v44, 1
    %vm64 = vcmp.lt.s32.totalorder %v44, 2
    %vm65 = vcmp.lt.s32.totalorder %v44, 3
    %vm66 = vcmp.lt.s32.totalorder %v44, 4
    %v67 = vsel %vm63, %v47, %v50
    %v68 = vsel %vm66, %v56, 2102212464
    %v69 = vsel %vm65, %v53, %v68
    %v70 = vsel %vm64, %v67, %v69
    %v71 = vsel %vm63, %v50, %v53
    %v72 = vsel %vm66, %v59, 920167782
    %v73 = vsel %vm65, %v56, %v72
    %v74 = vsel %vm64, %v71, %v73
    %v75 = vsel %vm63, %v53, %v56
    %v76 = vsel %vm66, %v62, 1326507024
    %v77 = vsel %vm65, %v59, %v76
    %v78 = vsel %vm64, %v75, %v77
    %v79 = vshll.u32 %v39, 8
    %v80 = vand.u32 %v79, 65535
    %v81 = vshrl.u32 %v79, 16
    %v82 = vand.u32 %v78, 65535
    %v83 = vshrl.u32 %v78, 16
    %v84 = vmul.u32 %v80, %v82
    %v85 = vmul.u32 %v80, %v83
    %v86 = vmul.u32 %v81, %v82
    %v87 = vmul.u32 %v81, %v83
    %v88 = vshll.u32 %v85, 16
    %v89 = vshrl.u32 %v85, 16
    %v90 = vshll.u32 %v86, 16
    %v91 = vshrl.u32 %v86, 16
    %vm92 = vc.u32 %v84, %v88
    %v93 = vsel %vm92, 1, 0
    %v94 = vadd.s32 %v84, %v88
    %v95 = vadd.s32 %v87, %v93
    %vm96 = vc.u32 %v94, %v90
    %v97 = vsel %vm96, 1, 0
    %v98 = vadd.s32 %v94, %v90
    %v99 = vadd.s32 %v95, %v97
    %v100 = vadd.s32 %v99, %v89
    %v101 = vadd.s32 %v100, %v91
    %v102 = vand.u32 %v79, 65535
    %v103 = vshrl.u32 %v79, 16
    %v104 = vand.u32 %v74, 65535
    %v105 = vshrl.u32 %v74, 16
    %v106 = vmul.u32 %v102, %v104
    %v107 = vmul.u32 %v102, %v105
    %v108 = vmul.u32 %v103, %v104
    %v109 = vmul.u32 %v103, %v105
    %v110 = vshll.u32 %v107, 16
    %v111 = vshrl.u32 %v107, 16
    %v112 = vshll.u32 %v108, 16
    %v113 = vshrl.u32 %v108, 16
    %vm114 = vc.u32 %v106, %v110
    %v115 = vsel %vm114, 1, 0
    %v116 = vadd.s32 %v106, %v110
    %v117 = vadd.s32 %v109, %v115
    %vm118 = vc.u32 %v116, %v112
    %v119 = vsel %vm118, 1, 0
    %v120 = vadd.s32 %v116, %v112
    %v121 = vadd.s32 %v117, %v119
    %v122 = vadd.s32 %v121, %v111
    %v123 = vadd.s32 %v122, %v113
    %v124 = vmul.u32 %v79, %v70
    %v125 = vadd.s32 %v101, %v120
    %vm126 = vc.u32 %v101, %v120
    %v127 = vadd.s32 %v123, 1
    %v128 = vsel %vm126, %v127, %v123
    %v129 = vadd.s32 %v124, %v128
    %v130 = vadd.s32 %v129, 536870912
    %v131 = vshrl.u32 %v130, 30
    %v132 = vshll.u32 %v131, 30
    %v133 = vsub.s32 %v129, %v132
    %vm134 = vcmp.lt.s32.totalorder %v133, 0
    %v135 = vsub.s32 0, %v133
    %v136 = vsel %vm134, %v135, %v133
    %v137 = vclz %v136
    %v138 = vsub.s32 %v137, 2
    %vm139 = vcmp.gt.s32.totalorder 0, %v138
    %v140 = vsel %vm139, 0, %v138
    %v141 = vsub.s32 32, %v140
    %v142 = vshll.u32 %v133, %v140
    %v143 = vshrl.u32 %v125, %v141
    %v144 = vor.u32 %v142, %v143
    %v145 = vsub.s32 4294967266, %v140
    %v146 = vadd.s32 %v145, 127
    %v147 = vshll.u32 %v146, 23
    %v148 = vor.u32 4788187, %v147
    %v149 = vand.u32 2147483647, %v148
    %v151 = vcvt.s32.f32 %v144
    %v152 = vmul.f32 %v151, %v149
    %v153 = vxor.u32 %v152, 2147483648
    %v154 = vsel %vm33, %v153, %v152
    %v155 = vsub.s32 4, %v131
    %v156 = vsel %vm33, %v155, %v131
    %v157 = vsel %vm32, %v30, %v154
    %v158 = vsel %vm32, 0, %v156
    %v159 = vmul.f32 %v157, %v157
    %v160 = vmul.f32 %v159, -0.001358992
    %v161 = vadd.f32 %v160, 0.041655596
    %v162 = vmul.f32 %v159, %v161
    %v163 = vadd.f32 %v162, -0.4999988
    %v164 = vmul.f32 %v159, %v163
    %v165 = vadd.f32 1.0, %v164
    %v166 = vmul.f32 %v157, %v157
    %v167 = vmul.f32 %v166, -0.00019511016
    %v168 = vadd.f32 %v167, 0.008332121
    %v169 = vmul.f32 %v166, %v168
    %v170 = vadd.f32 %v169, -0.16666654
    %v171 = vmul.f32 %v166, %v170
    %v172 = vadd.f32 %v171, 1.0
    %v173 = vmul.f32 %v172, %v157
    %vm174 = vweird.f32 %v30
    %v175 = vand.u32 %v158, 3
    %vm176 = vcmp.lt.s32.totalorder %v175, 2
    %vm177 = vcmp.eq.s32.totalorder %v175, 0
    %v178 = vxor.u32 %v173, 2147483648
    %v179 = vsel %vm177, %v165, %v178
    %vm180 = vcmp.eq.s32.totalorder %v175, 2
    %v181 = vxor.u32 %v165, 2147483648
    %v182 = vsel %vm180, %v181, %v173
    %v183 = vsel %vm176, %v179, %v182
    %v184 = vsel %vm174, nan, %v183
    %v185 = vsub.f32 1.0, %v184
    %v186 = vmul.f32 %v185, 10.0
    %v187 = vadd.f32 %v29, %v186
    %v188 = vld [vmem:[#allocation2] sm:$0xff]
    %vm189 = vcmask 261120
    %v190 = vsel %vm189, %v187, 0.0
    %191 = vadd.xlane.f32.xlu0 %v190
    %v192 = vpop.xlane.xlu0 %191
    %v193 = vadd.f32 %v188, %v192
    %vm194 = vcmask 7168
    %195 = vst.msk [vmem:[#allocation2] sm:$0xff] %vm194, %v193
    // Predicated region
    $region14: #{tpu_custom_call.1} parent=1 // pred_check
      %p196 = pneg %p22
    $region15: #{tpu_custom_call.1} parent=1 // pred_check_branch
      %198 = sbr.rel (%p196) target = $region17
    $region16: #{tpu_custom_call.1} parent=1 // pred_region
      %v199 = vld [vmem:[#allocation2] sm:$0xff]
      %200 = vst.msk [vmem:[%s1] sm:$0xff] %vm194, %v199
    $region17: #{tpu_custom_call.1} parent=1 // pred_fallthru
      _
    // Predicated region
    $region18: #{tpu_custom_call.1} parent=1 // pred_check
      _
    $region19: #{tpu_custom_call.1} parent=1 // pred_check_branch
      %202 = sbr.rel (0) target = $region21
    $region20: #{tpu_custom_call.1} parent=1 // pred_region
      _
    $region21: #{tpu_custom_call.1} parent=1 // pred_fallthru
      _
    // Predicated region
    $region22: #{tpu_custom_call.1} parent=1 // pred_check
      _
    $region23: #{tpu_custom_call.1} parent=1 // pred_check_branch
      %204 = sbr.rel (0) target = $region25
    $region24: #{tpu_custom_call.1} parent=1 // pred_region
      _
    $region25: #{tpu_custom_call.1} parent=1 // pred_fallthru
      _
    %205 = vsyncpa [#allocation4], 1

</llo_original>
